<compile_context>
chip_gen: v7x
topology: tpu7x:2x2x1
jax: 0.10.0
libtpu: 0.0.40
codegen_flags: <defaults>
</compile_context>

<pallas_src>
import functools
from typing import NamedTuple

import jax
import jax.numpy as jnp
from jax.experimental import pallas as pl
from jax.experimental.pallas import tpu as pltpu


# ----------------------------------------------------------------------------
# Small helpers
# ----------------------------------------------------------------------------

def _round_up(x, m):
    return ((x + m - 1) // m) * m


def _maybe_pad2d(a, rows, cols):
    pr, pc = rows - a.shape[0], cols - a.shape[1]
    if pr == 0 and pc == 0:
        return a
    return jnp.pad(a, ((0, pr), (0, pc)))


def _physical_vmem_bytes():
    try:
        return int(pltpu.get_tpu_info().vmem_capacity_bytes)
    except Exception:
        return 64 << 20  # conservative (v7x-sized) fallback


def _prefer_core_split():
    # v7x has 2 TensorCores per chip; only the "parallel" grid axis is
    # sharded across them, so make sure there are >= 2 token tiles there.
    try:
        return "v7" in jax.devices()[0].device_kind.lower()
    except Exception:
        return False


# ----------------------------------------------------------------------------
# VMEM budgets (double-buffered streamed tiles + resident scratch + temps)
# ----------------------------------------------------------------------------

def _fast_path_vmem(tn, din_p, dh_p, mm_bytes, out_bytes):
    x_tiles = 2 * tn * din_p * mm_bytes
    o_tiles = 2 * tn * din_p * out_bytes
    weights = 2 * (din_p * dh_p + dh_p * din_p) * mm_bytes  # resident but budgeted 2x
    biases = 2 * (dh_p + din_p) * 4
    h_interm = tn * dh_p * (4 + mm_bytes)   # f32 fc1 output + mm_dtype copy
    o_f32 = tn * din_p * 4                  # f32 fc2 output before cast/store
    return x_tiles + o_tiles + weights + biases + h_interm + o_f32


def _reduce_path_vmem(tn, tk, din_p, mm_bytes, out_bytes):
    x_tiles = 2 * tn * din_p * mm_bytes
    o_tiles = 2 * tn * din_p * out_bytes
    w1 = 2 * din_p * tk * mm_bytes
    w2 = 2 * tk * din_p * mm_bytes
    biases = 2 * (tk + din_p) * 4
    acc = tn * din_p * 4
    h_interm = tn * tk * (4 + mm_bytes)     # f32 fc1 slab + mm_dtype copy
    upd = tn * din_p * 4                    # accumulator-update temp
    return x_tiles + o_tiles + w1 + w2 + biases + acc + h_interm + upd


def _choose_reduce_tiles(din_p, dh_p, min_tn, max_tn, mm_bytes, out_bytes, cap):
    tn_opts = [t for t in (512, 256, 128, 64, 32, 16, 8)
               if min_tn <= t <= max_tn] or [min_tn]
    tk_opts = [t for t in (2048, 1024, 512, 256, 128)
               if t <= dh_p and dh_p % t == 0]
    best = None
    for tn in tn_opts:
        for tk in tk_opts:
            if _reduce_path_vmem(tn, tk, din_p, mm_bytes, out_bytes) <= cap:
                score = (tn * tk, tk, tn)
                if best is None or score > best[:1][0] if False else (
                        best is None or score > best[0]):
                    best = (score, tn, tk)
    if best is None:
        # TODO(synk): tile Din as a third grid axis (reusing a per-(i,k) h
        # scratch) for extreme Din; for now fail loudly instead of silently
        # exceeding the VMEM cap.
        raise ValueError(
            f"MLPBlock kernel: no (token_tile, hidden_tile) fits the VMEM "
            f"budget ({cap} bytes) for Din_p={din_p}, Dh_p={dh_p}.")
    return best[1], best[2]


# ----------------------------------------------------------------------------
# Kernels
# ----------------------------------------------------------------------------

def _mlp_fused_kernel(x_ref, w1_ref, b1_ref, w2_ref, b2_ref, o_ref):
    # Fast path: both weight matrices resident, 1-D grid over token tiles.
    h = jnp.dot(x_ref[...], w1_ref[...], preferred_element_type=jnp.float32)
    h = jnp.maximum(h + b1_ref[...], 0.0)                      # ReLU on VPU
    out = jnp.dot(h.astype(w2_ref.dtype), w2_ref[...],
                  preferred_element_type=jnp.float32)
    o_ref[...] = (out + b2_ref[...]).astype(o_ref.dtype)


def _mlp_reduce_kernel(x_ref, w1_ref, b1_ref, w2_ref, b2_ref, o_ref, acc_ref):
    # Reduction path: hidden dim tiled on the last ("arbitrary") grid axis,
    # f32 accumulator resident across it.
    k = pl.program_id(1)

    @pl.when(k == 0)
    def _init():
        # Fold fc2 bias into the accumulator once (broadcast hoisted here).
        acc_ref[...] = jnp.broadcast_to(b2_ref[...], acc_ref.shape)

    h = jnp.dot(x_ref[...], w1_ref[...], preferred_element_type=jnp.float32)
    h = jnp.maximum(h + b1_ref[...], 0.0)
    acc_ref[...] += jnp.dot(h.astype(w2_ref.dtype), w2_ref[...],
                            preferred_element_type=jnp.float32)

    @pl.when(k == pl.num_programs(1) - 1)
    def _writeback():
        o_ref[...] = acc_ref[...].astype(o_ref.dtype)


# ----------------------------------------------------------------------------
# Parameter preparation (pad + cast ONCE, outside the per-call path)
# ----------------------------------------------------------------------------

class PreparedParams(NamedTuple):
    w1: jax.Array      # [Din_p, Dh_p]  mm_dtype
    b1: jax.Array      # [1, Dh_p]      f32
    w2: jax.Array      # [Dh_p, Din_p]  mm_dtype
    b2: jax.Array      # [1, Din_p]     f32
    din: int
    dh: int
    din_p: int
    dh_p: int
    mm_dtype: jnp.dtype


def prepare_params(w1t, b1, w2t, b2, *, mm_dtype=jnp.bfloat16):
    """Pad feature dims to 128-multiples and cast matmul operands once.

    w1t: [Din, Dh], b1: [Dh], w2t: [Dh, Din], b2: [Din] (weights stored
    transposed relative to torch nn.Linear so matmuls are row-major).
    """
    din, dh = w1t.shape
    din_p = _round_up(max(din, 128), 128)
    dh_p = _round_up(max(dh, 128), 128)
    mm_dtype = jnp.dtype(mm_dtype)
    w1 = _maybe_pad2d(w1t.astype(mm_dtype), din_p, dh_p)
    w2 = _maybe_pad2d(w2t.astype(mm_dtype), dh_p, din_p)
    b1p = _maybe_pad2d(b1.reshape(1, dh).astype(jnp.float32), 1, dh_p)
    b2p = _maybe_pad2d(b2.reshape(1, din).astype(jnp.float32), 1, din_p)
    return PreparedParams(w1, b1p, w2, b2p, din, dh, din_p, dh_p, mm_dtype)


# ----------------------------------------------------------------------------
# Wrapper
# ----------------------------------------------------------------------------

def mlp_block_prepared(x, params: PreparedParams, *, vmem_cap_bytes=None):
    """fc2(relu(fc1(x))) over the last axis of x, any leading dims."""
    orig_shape = x.shape
    din = orig_shape[-1]
    assert din == params.din, (din, params.din)
    out_dtype = x.dtype
    mm_dtype = params.mm_dtype
    mm_bytes = jnp.dtype(mm_dtype).itemsize
    out_bytes = jnp.dtype(out_dtype).itemsize
    din_p, dh_p = params.din_p, params.dh_p

    x2 = x.reshape(-1, din)
    n = x2.shape[0]
    if x2.dtype != mm_dtype:
        x2 = x2.astype(mm_dtype)

    # Generation-aware VMEM budget.
    phys_vmem = _physical_vmem_bytes()
    if vmem_cap_bytes is None:
        vmem_cap_bytes = int(phys_vmem * 0.72)   # ~46 MiB v7x, ~92 MiB v5e/v6e
    limit_ceiling = int(phys_vmem * 0.82)

    # Token-tile bounds: sub-32-bit operands pack >=2 rows/sublane.
    min_tn = 8 if mm_bytes >= 4 else (16 if mm_bytes == 2 else 32)
    n8 = max(_round_up(n, 8), min_tn)
    max_tn = n8
    if _prefer_core_split() and n8 >= 2 * min_tn:
        max_tn = max(min_tn, n8 // 2)   # keep >=2 token tiles for megacore

    tn_opts = [t for t in (512, 256, 128, 64, 32, 16, 8)
               if min_tn <= t <= max_tn] or [min_tn]

    # ---- Fast path: both weights resident, no reduction axis -------------
    fast_tn = None
    for t in tn_opts:
        if _fast_path_vmem(t, din_p, dh_p, mm_bytes, out_bytes) <= vmem_cap_bytes:
            fast_tn = t
            break

    if fast_tn is not None:
        tn = fast_tn
        n_p = _round_up(max(n, tn), tn)
        x_p = _maybe_pad2d(x2, n_p, din_p)   # zero padding is inert
        vmem_need = _fast_path_vmem(tn, din_p, dh_p, mm_bytes, out_bytes)
        vmem_limit = max(min(int(vmem_need * 1.25) + (2 << 20), limit_ceiling),
                         32 << 20)
        out = pl.pallas_call(
            _mlp_fused_kernel,
            out_shape=jax.ShapeDtypeStruct((n_p, din_p), out_dtype),
            grid_spec=pltpu.PrefetchScalarGridSpec(
                num_scalar_prefetch=0,
                grid=(n_p // tn,),
                in_specs=[
                    pl.BlockSpec((tn, din_p), lambda i: (i, 0)),     # x tile
                    pl.BlockSpec((din_p, dh_p), lambda i: (0, 0)),   # W1 (resident)
                    pl.BlockSpec((1, dh_p), lambda i: (0, 0)),       # b1
                    pl.BlockSpec((dh_p, din_p), lambda i: (0, 0)),   # W2 (resident)
                    pl.BlockSpec((1, din_p), lambda i: (0, 0)),      # b2
                ],
                out_specs=pl.BlockSpec((tn, din_p), lambda i: (i, 0)),
            ),
            compiler_params=pltpu.CompilerParams(
                dimension_semantics=("parallel",),
                vmem_limit_bytes=vmem_limit,
            ),
        )(x_p, params.w1, params.b1, params.w2, params.b2)
        return out[:n, :din].reshape(orig_shape)

    # ---- Reduction path: hidden dim tiled, f32 accumulator ----------------
    tn, tk = _choose_reduce_tiles(din_p, dh_p, min_tn, max_tn,
                                  mm_bytes, out_bytes, vmem_cap_bytes)
    n_p = _round_up(max(n, tn), tn)
    x_p = _maybe_pad2d(x2, n_p, din_p)
    vmem_need = _reduce_path_vmem(tn, tk, din_p, mm_bytes, out_bytes)
    vmem_limit = max(min(int(vmem_need * 1.25) + (2 << 20), limit_ceiling),
                     32 << 20)
    grid = (n_p // tn, dh_p // tk)

    out = pl.pallas_call(
        _mlp_reduce_kernel,
        out_shape=jax.ShapeDtypeStruct((n_p, din_p), out_dtype),
        grid_spec=pltpu.PrefetchScalarGridSpec(
            num_scalar_prefetch=0,
            grid=grid,
            in_specs=[
                pl.BlockSpec((tn, din_p), lambda i, k: (i, 0)),   # x tile
                pl.BlockSpec((din_p, tk), lambda i, k: (0, k)),   # W1 k-slab
                pl.BlockSpec((1, tk), lambda i, k: (0, k)),       # b1 k-slab
                pl.BlockSpec((tk, din_p), lambda i, k: (k, 0)),   # W2 k-slab
                pl.BlockSpec((1, din_p), lambda i, k: (0, 0)),    # b2 (resident)
            ],
            out_specs=pl.BlockSpec((tn, din_p), lambda i, k: (i, 0)),
            scratch_shapes=[pltpu.VMEM((tn, din_p), jnp.float32)],
        ),
        compiler_params=pltpu.CompilerParams(
            dimension_semantics=("parallel", "arbitrary"),
            vmem_limit_bytes=vmem_limit,
        ),
    )(x_p, params.w1, params.b1, params.w2, params.b2)

    return out[:n, :din].reshape(orig_shape)


def mlp_block(x, w1t, b1, w2t, b2, *, mm_dtype=jnp.bfloat16, vmem_cap_bytes=None):
    """Convenience wrapper: prepares (pads/casts) params per call.

    For repeated calls, prefer prepare_params(...) once + mlp_block_prepared().
    """
    params = prepare_params(w1t, b1, w2t, b2, mm_dtype=mm_dtype)
    return mlp_block_prepared(x, params, vmem_cap_bytes=vmem_cap_bytes)


# ----------------------------------------------------------------------------
# Parameter init mimicking nn.Linear
# ----------------------------------------------------------------------------

def init_params(key, input_dim, hidden_dim, dtype=jnp.float32):
    """Uniform(-1/sqrt(fan_in), +1/sqrt(fan_in)), like torch nn.Linear."""
    k1, k2, k3, k4 = jax.random.split(key, 4)
    bound1 = 1.0 / (input_dim ** 0.5)
    bound2 = 1.0 / (hidden_dim ** 0.5)
    # stored already transposed: [in, out]
    w1t = jax.random.uniform(k1, (input_dim, hidden_dim), dtype, -bound1, bound1)
    b1 = jax.random.uniform(k2, (hidden_dim,), dtype, -bound1, bound1)
    w2t = jax.random.uniform(k3, (hidden_dim, input_dim), dtype, -bound2, bound2)
    b2 = jax.random.uniform(k4, (input_dim,), dtype, -bound2, bound2)
    return w1t, b1, w2t, b2


if __name__ == "__main__":
    key = jax.random.PRNGKey(0)
    kx, kp = jax.random.split(key)

    batch, seq, input_dim, hidden_dim = 2, 8, 32, 64
    x = jax.random.normal(kx, (batch, seq, input_dim), dtype=jnp.float32)
    w1t, b1, w2t, b2 = init_params(kp, input_dim, hidden_dim)

    # Plain-JAX reference (same math as the PyTorch module).
    ref = jnp.maximum(x @ w1t + b1, 0.0) @ w2t + b2

    # 1) Full-precision path (f32 MXU operands) — strict check.
    out_f32 = mlp_block(x, w1t, b1, w2t, b2, mm_dtype=jnp.float32)
    out_f32 = jax.block_until_ready(out_f32)
    assert out_f32.shape == x.shape
    assert jnp.allclose(out_f32, ref, atol=1e-4, rtol=1e-4)

    # 2) Default mixed-precision path (bf16 operands, f32 accumulation) with
    #    weights pre-padded/pre-cast once; expected bf16-level tolerance.
    params = prepare_params(w1t, b1, w2t, b2)          # mm_dtype = bf16
    out_bf16 = mlp_block_prepared(x, params)
    out_bf16 = jax.block_until_ready(out_bf16)
    assert out_bf16.shape == x.shape
    assert jnp.allclose(out_bf16, ref, atol=5e-2, rtol=5e-2)

    print("KERNEL_OK")
</pallas_src>

<mosaic_0001>
module attributes {stable_mosaic.version = 11 : i64} {
  func.func @_mlp_fused_kernel(%arg0: i32, %arg1: memref<16x128xf32, #tpu.memory_space<vmem>>, %arg2: memref<128x128xf32, #tpu.memory_space<vmem>>, %arg3: memref<1x128xf32, #tpu.memory_space<vmem>>, %arg4: memref<128x128xf32, #tpu.memory_space<vmem>>, %arg5: memref<1x128xf32, #tpu.memory_space<vmem>>, %arg6: memref<16x128xf32, #tpu.memory_space<vmem>>) attributes {dimension_semantics = [#tpu.dimension_semantics<parallel>], iteration_bounds = array<i64: 1>, scalar_prefetch = 0 : i64, scratch_operands = 0 : i64, tpu.core_type = #tpu.core_type<tc>, window_params = [{transform_indices = @transform_0, window_bounds = array<i64: 16, 128>}, {pipeline_mode = #tpu.pipeline_mode<synchronous>, transform_indices = @transform_1, window_bounds = array<i64: 128, 128>}, {pipeline_mode = #tpu.pipeline_mode<synchronous>, transform_indices = @transform_2, window_bounds = array<i64: 1, 128>}, {pipeline_mode = #tpu.pipeline_mode<synchronous>, transform_indices = @transform_3, window_bounds = array<i64: 128, 128>}, {pipeline_mode = #tpu.pipeline_mode<synchronous>, transform_indices = @transform_4, window_bounds = array<i64: 1, 128>}, {transform_indices = @transform_5, window_bounds = array<i64: 16, 128>}]} {
    %c0 = arith.constant 0 : index
    %c0_0 = arith.constant 0 : index
    %0 = vector.load %arg1[%c0, %c0_0] : memref<16x128xf32, #tpu.memory_space<vmem>>, vector<16x128xf32>
    %c0_1 = arith.constant 0 : index
    %c0_2 = arith.constant 0 : index
    %1 = vector.load %arg2[%c0_1, %c0_2] : memref<128x128xf32, #tpu.memory_space<vmem>>, vector<128x128xf32>
    %cst = arith.constant dense<0.000000e+00> : vector<16x128xf32>
    %2 = tpu.matmul %0, %1, %cst {dimension_numbers = #tpu.dot_dimension_numbers<[1], [0], [0], [1], [0, 0, 1, 1], [], []>} : vector<16x128xf32>, vector<128x128xf32>, vector<16x128xf32> -> vector<16x128xf32>
    %c0_3 = arith.constant 0 : index
    %c0_4 = arith.constant 0 : index
    %3 = vector.load %arg3[%c0_3, %c0_4] : memref<1x128xf32, #tpu.memory_space<vmem>>, vector<1x128xf32>
    %4 = vector.broadcast %3 : vector<1x128xf32> to vector<16x128xf32>
    %5 = arith.addf %2, %4 : vector<16x128xf32>
    %cst_5 = arith.constant 0.000000e+00 : f32
    %6 = vector.broadcast %cst_5 : f32 to vector<16x128xf32>
    %7 = arith.maximumf %5, %6 : vector<16x128xf32>
    %c0_6 = arith.constant 0 : index
    %c0_7 = arith.constant 0 : index
    %8 = vector.load %arg4[%c0_6, %c0_7] : memref<128x128xf32, #tpu.memory_space<vmem>>, vector<128x128xf32>
    %cst_8 = arith.constant dense<0.000000e+00> : vector<16x128xf32>
    %9 = tpu.matmul %7, %8, %cst_8 {dimension_numbers = #tpu.dot_dimension_numbers<[1], [0], [0], [1], [0, 0, 1, 1], [], []>} : vector<16x128xf32>, vector<128x128xf32>, vector<16x128xf32> -> vector<16x128xf32>
    %c0_9 = arith.constant 0 : index
    %c0_10 = arith.constant 0 : index
    %10 = vector.load %arg5[%c0_9, %c0_10] : memref<1x128xf32, #tpu.memory_space<vmem>>, vector<1x128xf32>
    %11 = vector.broadcast %10 : vector<1x128xf32> to vector<16x128xf32>
    %12 = arith.addf %9, %11 : vector<16x128xf32>
    %c0_11 = arith.constant 0 : index
    %c0_12 = arith.constant 0 : index
    %13 = vector.load %arg6[%c0_11, %c0_12] : memref<16x128xf32, #tpu.memory_space<vmem>>, vector<16x128xf32>
    tpu.vector_store %arg6[%c0_11, %c0_12], %12 {strides = array<i32>} : memref<16x128xf32, #tpu.memory_space<vmem>>, vector<16x128xf32>,
    return
  }
  func.func @transform_0(%arg0: i32) -> (i32, i32) {
    %c0_i32 = arith.constant 0 : i32
    %c0_i32_0 = arith.constant 0 : i32
    return %arg0, %c0_i32 : i32, i32
  }
  func.func @transform_1(%arg0: i32) -> (i32, i32) {
    %c0_i32 = arith.constant 0 : i32
    %c0_i32_0 = arith.constant 0 : i32
    %c0_i32_1 = arith.constant 0 : i32
    return %c0_i32, %c0_i32_0 : i32, i32
  }
  func.func @transform_2(%arg0: i32) -> (i32, i32) {
    %c0_i32 = arith.constant 0 : i32
    %c0_i32_0 = arith.constant 0 : i32
    %c0_i32_1 = arith.constant 0 : i32
    return %c0_i32, %c0_i32_0 : i32, i32
  }
  func.func @transform_3(%arg0: i32) -> (i32, i32) {
    %c0_i32 = arith.constant 0 : i32
    %c0_i32_0 = arith.constant 0 : i32
    %c0_i32_1 = arith.constant 0 : i32
    return %c0_i32, %c0_i32_0 : i32, i32
  }
  func.func @transform_4(%arg0: i32) -> (i32, i32) {
    %c0_i32 = arith.constant 0 : i32
    %c0_i32_0 = arith.constant 0 : i32
    %c0_i32_1 = arith.constant 0 : i32
    return %c0_i32, %c0_i32_0 : i32, i32
  }
  func.func @transform_5(%arg0: i32) -> (i32, i32) {
    %c0_i32 = arith.constant 0 : i32
    %c0_i32_0 = arith.constant 0 : i32
    return %arg0, %c0_i32 : i32, i32
  }
}

</mosaic_0001>

<llo_original>
// kernel: tpu_custom_call.1
$region0: #{tpu_custom_call.1}
  #allocation0 [shape = 'u32[]', space=smem, size = 0x4, offset = 0x4, fixed_abs, tag = 'smem constant byte address 0x4 - core index']
  #allocation1 [shape = 'u32[144,128]{1,0:T(1,128)}', space=vmem, size = 0x12000, scoped, tag = 'internal scratch']
  %s0 = inlined_call_operand.hbm [shape: f32[16,128], index: 0, kind: input, shape index: {}]
  %s1 = inlined_call_operand.hbm [shape: f32[128,128], index: 1, kind: input, shape index: {}]
  %s2 = inlined_call_operand.vmem [shape: f32[1,128], index: 2, kind: input, shape index: {}]
  %s3 = inlined_call_operand.hbm [shape: f32[128,128], index: 3, kind: input, shape index: {}]
  %s4 = inlined_call_operand.vmem [shape: f32[1,128], index: 4, kind: input, shape index: {}]
  %s5 = inlined_call_operand.hbm [shape: f32[16,128], index: 5, kind: output, shape index: {}]
  %s6 = sld [smem:[#allocation0]]
  $region42: #{tpu_custom_call.1} parent=0
    _
  %s8 = ssub.s32 1, %s6
  %s9 = scalar_select 0, %s8, %s6
  $region1: #{tpu_custom_call.1} parent=0
    #allocation2 [shape = 'u8[8192]{0}', space=vmem, size = 0x2000, scoped, tag = 'input window, operand 0, single buffered']
    #allocation3 [shape = 's32[1]{0}', space=sflag, size = 0x4, scoped, tag = 'scoped memory for tpu_custom_call.1']
    #allocation4 [shape = 's32[1]{0}', space=sflag, size = 0x4, scoped, tag = 'scoped memory for tpu_custom_call.1']
    #allocation5 [shape = 'u8[65536]{0}', space=vmem, size = 0x10000, scoped, tag = 'input window, operand 1, single buffered']
    #allocation6 [shape = 's32[1]{0}', space=sflag, size = 0x4, scoped, tag = 'scoped memory for tpu_custom_call.1']
    #allocation7 [shape = 'u8[65536]{0}', space=vmem, size = 0x10000, scoped, tag = 'input window, operand 3, single buffered']
    #allocation8 [shape = 'u8[8192]{0}', space=vmem, size = 0x2000, scoped, tag = 'output window, operand 0, single buffered']
    %10 = vsyncpa [#allocation3], 0
    %11 = vsyncpa [#allocation6], 0
    %12 = vsyncpa [#allocation4], 0
    // Predicated region
    $region2: #{tpu_custom_call.1} parent=1 // pred_check
      _
    $region3: #{tpu_custom_call.1} parent=1 // pred_check_branch
      %14 = sbr.rel (0) target = $region5
    $region4: #{tpu_custom_call.1} parent=1 // pred_region
      %s16 = ssub.s32 256, 256
      %17 = vsyncadd [#allocation3], %s16
      %s18 = sshll.u32 [#allocation2], 4
      %s19 = int_to_ptr.vmem [resolvable:$true] %s18
      %24 = dma.hbm_to_vmem [thread:$0]  %s0, 256, %s19, [#allocation3], 128, 128, 8
    $region5: #{tpu_custom_call.1} parent=1 // pred_fallthru
      _
    // Predicated region
    $region6: #{tpu_custom_call.1} parent=1 // pred_check
      _
    $region7: #{tpu_custom_call.1} parent=1 // pred_check_branch
      %26 = sbr.rel (0) target = $region9
    $region8: #{tpu_custom_call.1} parent=1 // pred_region
      %s28 = ssub.s32 2048, 2048
      %29 = vsyncadd [#allocation6], %s28
      %s30 = sshll.u32 [#allocation5], 4
      %s31 = int_to_ptr.vmem [resolvable:$true] %s30
      %36 = dma.hbm_to_vmem [thread:$0]  %s1, 2048, %s31, [#allocation6], 128, 128, 8
    $region9: #{tpu_custom_call.1} parent=1 // pred_fallthru
      _
    // Predicated region
    $region10: #{tpu_custom_call.1} parent=1 // pred_check
      _
    $region11: #{tpu_custom_call.1} parent=1 // pred_check_branch
      %38 = sbr.rel (0) target = $region13
    $region12: #{tpu_custom_call.1} parent=1 // pred_region
      _
    $region13: #{tpu_custom_call.1} parent=1 // pred_fallthru
      _
    // Predicated region
    $region14: #{tpu_custom_call.1} parent=1 // pred_check
      _
    $region15: #{tpu_custom_call.1} parent=1 // pred_check_branch
      %40 = sbr.rel (0) target = $region17
    $region16: #{tpu_custom_call.1} parent=1 // pred_region
      %s42 = ssub.s32 2048, 2048
      %43 = vsyncadd [#allocation6], %s42
      %s44 = sshll.u32 [#allocation7], 4
      %s45 = int_to_ptr.vmem [resolvable:$true] %s44
      %50 = dma.hbm_to_vmem [thread:$0]  %s3, 2048, %s45, [#allocation6], 128, 128, 8
    $region17: #{tpu_custom_call.1} parent=1 // pred_fallthru
      _
    // Predicated region
    $region18: #{tpu_custom_call.1} parent=1 // pred_check
      _
    $region19: #{tpu_custom_call.1} parent=1 // pred_check_branch
      %52 = sbr.rel (0) target = $region21
    $region20: #{tpu_custom_call.1} parent=1 // pred_region
      _
    $region21: #{tpu_custom_call.1} parent=1 // pred_fallthru
      _
    // Predicated region
    $region22: #{tpu_custom_call.1} parent=1 // pred_check
      _
    $region23: #{tpu_custom_call.1} parent=1 // pred_check_branch
      %54 = sbr.rel (0) target = $region25
    $region24: #{tpu_custom_call.1} parent=1 // pred_region
      %55 = dma.done [#allocation3], 256
    $region25: #{tpu_custom_call.1} parent=1 // pred_fallthru
      _
    // Predicated region
    $region26: #{tpu_custom_call.1} parent=1 // pred_check
      _
    $region27: #{tpu_custom_call.1} parent=1 // pred_check_branch
      %57 = sbr.rel (0) target = $region29
    $region28: #{tpu_custom_call.1} parent=1 // pred_region
      %58 = dma.done [#allocation6], 2048
    $region29: #{tpu_custom_call.1} parent=1 // pred_fallthru
      _
    // Predicated region
    $region30: #{tpu_custom_call.1} parent=1 // pred_check
      _
    $region31: #{tpu_custom_call.1} parent=1 // pred_check_branch
      %60 = sbr.rel (0) target = $region33
    $region32: #{tpu_custom_call.1} parent=1 // pred_region
      %61 = dma.done [#allocation6], 2048
    $region33: #{tpu_custom_call.1} parent=1 // pred_fallthru
      _
    %v62 = vld [vmem:[#allocation2] sm:$0xff]
    %v63 = vld [vmem:[#allocation2 + $0x8] sm:$0xff]
    %v64 = vld [vmem:[#allocation5] sm:$0xff]
    %v65 = vld [vmem:[#allocation5 + $0x8] sm:$0xff]
    %v66 = vld [vmem:[#allocation5 + $0x10] sm:$0xff]
    %v67 = vld [vmem:[#allocation5 + $0x18] sm:$0xff]
    %v68 = vld [vmem:[#allocation5 + $0x20] sm:$0xff]
    %v69 = vld [vmem:[#allocation5 + $0x28] sm:$0xff]
    %v70 = vld [vmem:[#allocation5 + $0x30] sm:$0xff]
    %v71 = vld [vmem:[#allocation5 + $0x38] sm:$0xff]
    %v72 = vld [vmem:[#allocation5 + $0x40] sm:$0xff]
    %v73 = vld [vmem:[#allocation5 + $0x48] sm:$0xff]
    %v74 = vld [vmem:[#allocation5 + $0x50] sm:$0xff]
    %v75 = vld [vmem:[#allocation5 + $0x58] sm:$0xff]
    %v76 = vld [vmem:[#allocation5 + $0x60] sm:$0xff]
    %v77 = vld [vmem:[#allocation5 + $0x68] sm:$0xff]
    %v78 = vld [vmem:[#allocation5 + $0x70] sm:$0xff]
    %v79 = vld [vmem:[#allocation5 + $0x78] sm:$0xff]
    %v80 = vld [vmem:[%s2] sm:$0x1]
    %v82 = vlaneseq
    %v83 = vshrl.u32 %v82, 7
    %v84 = vsub.s32 0, %v83
    %v85 = vrot.slane %v80, %v84
    %87 = vmatprep.subr.mxu0 0.0
    %88 = vmatpush1.msra.mxu0 %v64
    %89 = vmatprep.subr.mxu0 0.0
    %90 = vmatpush1.msra.mxu0 %v65
    %91 = vmatprep.subr.mxu0 0.0
    %92 = vmatpush1.msra.mxu0 %v66
    %93 = vmatprep.subr.mxu0 0.0
    %94 = vmatpush1.msra.mxu0 %v67
    %95 = vmatprep.subr.mxu0 0.0
    %96 = vmatpush1.msra.mxu0 %v68
    %97 = vmatprep.subr.mxu0 0.0
    %98 = vmatpush1.msra.mxu0 %v69
    %99 = vmatprep.subr.mxu0 0.0
    %100 = vmatpush1.msra.mxu0 %v70
    %101 = vmatprep.subr.mxu0 0.0
    %102 = vmatpush1.msra.mxu0 %v71
    %103 = vmatprep.subr.mxu0 0.0
    %104 = vmatpush1.msra.mxu0 %v72
    %105 = vmatprep.subr.mxu0 0.0
    %106 = vmatpush1.msra.mxu0 %v73
    %107 = vmatprep.subr.mxu0 0.0
    %108 = vmatpush1.msra.mxu0 %v74
    %109 = vmatprep.subr.mxu0 0.0
    %110 = vmatpush1.msra.mxu0 %v75
    %111 = vmatprep.subr.mxu0 0.0
    %112 = vmatpush1.msra.mxu0 %v76
    %113 = vmatprep.subr.mxu0 0.0
    %114 = vmatpush1.msra.mxu0 %v77
    %115 = vmatprep.subr.mxu0 0.0
    %116 = vmatpush1.msra.mxu0 %v78
    %117 = vmatprep.subr.mxu0 0.0
    %118 = vmatpush1.msra.mxu0 %v79
    %119 = vmatprep.subr.mxu0 0.0
    %120 = vmatpush1.msra.mxu0 0.0
    %121 = vmatprep.subr.mxu0 0.0
    %122 = vmatpush1.msra.mxu0 0.0
    %123 = vmatprep.subr.mxu0 0.0
    %124 = vmatpush1.msra.mxu0 0.0
    %125 = vmatprep.subr.mxu0 0.0
    %126 = vmatpush1.msra.mxu0 0.0
    %127 = vmatprep.subr.mxu0 0.0
    %128 = vmatpush1.msra.mxu0 0.0
    %129 = vmatprep.subr.mxu0 0.0
    %130 = vmatpush1.msra.mxu0 0.0
    %131 = vmatprep.subr.mxu0 0.0
    %132 = vmatpush1.msra.mxu0 0.0
    %133 = vmatprep.subr.mxu0 0.0
    %134 = vmatpush1.msra.mxu0 0.0
    %135 = vmatprep.subr.mxu0 0.0
    %136 = vmatpush1.msra.mxu0 0.0
    %137 = vmatprep.subr.mxu0 0.0
    %138 = vmatpush1.msra.mxu0 0.0
    %139 = vmatprep.subr.mxu0 0.0
    %140 = vmatpush1.msra.mxu0 0.0
    %141 = vmatprep.subr.mxu0 0.0
    %142 = vmatpush1.msra.mxu0 0.0
    %143 = vmatprep.subr.mxu0 0.0
    %144 = vmatpush1.msra.mxu0 0.0
    %145 = vmatprep.subr.mxu0 0.0
    %146 = vmatpush1.msra.mxu0 0.0
    %147 = vmatprep.subr.mxu0 0.0
    %148 = vmatpush1.msra.mxu0 0.0
    %149 = vmatprep.subr.mxu0 0.0
    %150 = vmatpush1.msra.mxu0 0.0
    %151 = vmatprep.mubr.f32.mxu0 0.0
    %152 = vmatmul.mubr.f32.gmra.mrb[0].mxu0 %v62
    %v153 = vpop.f32.mrb[0].mxu0
    %v154 = vadd.f32 %v85, %v153
    %v155 = vpop.f32.mrb[0].mxu0
    %156 = vmatprep.mubr.f32.mxu0 0.0
    %157 = vmatmul.mubr.f32.gmra.mrb[0].mxu0 %v63
    %v158 = vpop.f32.mrb[0].mxu0
    %v159 = vadd.f32 %v85, %v158
    %v160 = vpop.f32.mrb[0].mxu0
    %161 = vdwg.mxu0
    %v162 = vmax.f32 %v154, 0.0
    %v163 = vmax.f32 %v159, 0.0
    %v164 = vld [vmem:[#allocation7] sm:$0xff]
    %v165 = vld [vmem:[#allocation7 + $0x8] sm:$0xff]
    %v166 = vld [vmem:[#allocation7 + $0x10] sm:$0xff]
    %v167 = vld [vmem:[#allocation7 + $0x18] sm:$0xff]
    %v168 = vld [vmem:[#allocation7 + $0x20] sm:$0xff]
    %v169 = vld [vmem:[#allocation7 + $0x28] sm:$0xff]
    %v170 = vld [vmem:[#allocation7 + $0x30] sm:$0xff]
    %v171 = vld [vmem:[#allocation7 + $0x38] sm:$0xff]
    %v172 = vld [vmem:[#allocation7 + $0x40] sm:$0xff]
    %v173 = vld [vmem:[#allocation7 + $0x48] sm:$0xff]
    %v174 = vld [vmem:[#allocation7 + $0x50] sm:$0xff]
    %v175 = vld [vmem:[#allocation7 + $0x58] sm:$0xff]
    %v176 = vld [vmem:[#allocation7 + $0x60] sm:$0xff]
    %v177 = vld [vmem:[#allocation7 + $0x68] sm:$0xff]
    %v178 = vld [vmem:[#allocation7 + $0x70] sm:$0xff]
    %v179 = vld [vmem:[#allocation7 + $0x78] sm:$0xff]
    %v180 = vld [vmem:[%s4] sm:$0x1]
    %v182 = vlaneseq
    %v183 = vshrl.u32 %v182, 7
    %v184 = vsub.s32 0, %v183
    %v185 = vrot.slane %v180, %v184
    %187 = vmatprep.subr.mxu0 0.0
    %188 = vmatpush1.msra.mxu0 %v164
    %189 = vmatprep.subr.mxu0 0.0
    %190 = vmatpush1.msra.mxu0 %v165
    %191 = vmatprep.subr.mxu0 0.0
    %192 = vmatpush1.msra.mxu0 %v166
    %193 = vmatprep.subr.mxu0 0.0
    %194 = vmatpush1.msra.mxu0 %v167
    %195 = vmatprep.subr.mxu0 0.0
    %196 = vmatpush1.msra.mxu0 %v168
    %197 = vmatprep.subr.mxu0 0.0
    %198 = vmatpush1.msra.mxu0 %v169
    %199 = vmatprep.subr.mxu0 0.0
    %200 = vmatpush1.msra.mxu0 %v170
    %201 = vmatprep.subr.mxu0 0.0
    %202 = vmatpush1.msra.mxu0 %v171
    %203 = vmatprep.subr.mxu0 0.0
    %204 = vmatpush1.msra.mxu0 %v172
    %205 = vmatprep.subr.mxu0 0.0
    %206 = vmatpush1.msra.mxu0 %v173
    %207 = vmatprep.subr.mxu0 0.0
    %208 = vmatpush1.msra.mxu0 %v174
    %209 = vmatprep.subr.mxu0 0.0
    %210 = vmatpush1.msra.mxu0 %v175
    %211 = vmatprep.subr.mxu0 0.0
    %212 = vmatpush1.msra.mxu0 %v176
    %213 = vmatprep.subr.mxu0 0.0
    %214 = vmatpush1.msra.mxu0 %v177
    %215 = vmatprep.subr.mxu0 0.0
    %216 = vmatpush1.msra.mxu0 %v178
    %217 = vmatprep.subr.mxu0 0.0
    %218 = vmatpush1.msra.mxu0 %v179
    %219 = vmatprep.subr.mxu0 0.0
    %220 = vmatpush1.msra.mxu0 0.0
    %221 = vmatprep.subr.mxu0 0.0
    %222 = vmatpush1.msra.mxu0 0.0
    %223 = vmatprep.subr.mxu0 0.0
    %224 = vmatpush1.msra.mxu0 0.0
    %225 = vmatprep.subr.mxu0 0.0
    %226 = vmatpush1.msra.mxu0 0.0
    %227 = vmatprep.subr.mxu0 0.0
    %228 = vmatpush1.msra.mxu0 0.0
    %229 = vmatprep.subr.mxu0 0.0
    %230 = vmatpush1.msra.mxu0 0.0
    %231 = vmatprep.subr.mxu0 0.0
    %232 = vmatpush1.msra.mxu0 0.0
    %233 = vmatprep.subr.mxu0 0.0
    %234 = vmatpush1.msra.mxu0 0.0
    %235 = vmatprep.subr.mxu0 0.0
    %236 = vmatpush1.msra.mxu0 0.0
    %237 = vmatprep.subr.mxu0 0.0
    %238 = vmatpush1.msra.mxu0 0.0
    %239 = vmatprep.subr.mxu0 0.0
    %240 = vmatpush1.msra.mxu0 0.0
    %241 = vmatprep.subr.mxu0 0.0
    %242 = vmatpush1.msra.mxu0 0.0
    %243 = vmatprep.subr.mxu0 0.0
    %244 = vmatpush1.msra.mxu0 0.0
    %245 = vmatprep.subr.mxu0 0.0
    %246 = vmatpush1.msra.mxu0 0.0
    %247 = vmatprep.subr.mxu0 0.0
    %248 = vmatpush1.msra.mxu0 0.0
    %249 = vmatprep.subr.mxu0 0.0
    %250 = vmatpush1.msra.mxu0 0.0
    %251 = vmatprep.mubr.f32.mxu0 0.0
    %252 = vmatmul.mubr.f32.gmra.mrb[0].mxu0 %v162
    %v253 = vpop.f32.mrb[0].mxu0
    %v254 = vadd.f32 %v185, %v253
    %v255 = vpop.f32.mrb[0].mxu0
    %256 = vmatprep.mubr.f32.mxu0 0.0
    %257 = vmatmul.mubr.f32.gmra.mrb[0].mxu0 %v163
    %v258 = vpop.f32.mrb[0].mxu0
    %v259 = vadd.f32 %v185, %v258
    %v260 = vpop.f32.mrb[0].mxu0
    %261 = vdwg.mxu0
    %262 = vst [vmem:[#allocation8] sm:$0xff] %v254
    %263 = vst [vmem:[#allocation8 + $0x8] sm:$0xff] %v259
    // Predicated region
    $region34: #{tpu_custom_call.1} parent=1 // pred_check
      _
    $region35: #{tpu_custom_call.1} parent=1 // pred_check_branch
      %265 = sbr.rel (0) target = $region37
    $region36: #{tpu_custom_call.1} parent=1 // pred_region
      %s267 = ssub.s32 256, 256
      %268 = vsyncadd [#allocation4], %s267
      %s269 = sshll.u32 [#allocation8], 4
      %s270 = int_to_ptr.vmem [resolvable:$true] %s269
      %275 = dma.vmem_to_hbm [thread:$0]  %s270, 256, %s5, [#allocation4], 128, 128, 8
    $region37: #{tpu_custom_call.1} parent=1 // pred_fallthru
      _
    // Predicated region
    $region38: #{tpu_custom_call.1} parent=1 // pred_check
      _
    $region39: #{tpu_custom_call.1} parent=1 // pred_check_branch
      %277 = sbr.rel (0) target = $region41
    $region40: #{tpu_custom_call.1} parent=1 // pred_region
      %278 = dma.done [#allocation4], 256
    $region41: #{tpu_custom_call.1} parent=1 // pred_fallthru
      _
    %279 = vsyncpa [#allocation3], 1
    %280 = vsyncpa [#allocation6], 1
    %281 = vsyncpa [#allocation4], 1

</llo_original>
